<compile_context>
chip_gen: v6e
topology: v6e:2x2x1
jax: 0.10.0
libtpu: 0.0.40
codegen_flags: <defaults>
</compile_context>

<pallas_src>
import jax
import jax.numpy as jnp
from jax.experimental import pallas as pl
from jax.experimental.pallas import tpu as pltpu

SELU_ALPHA = 1.6732632423543772
SELU_SCALE = 1.0507009873554805

D_IN = 256
D_H1 = 128
D_H2 = 64
D_OUT = 3
D_OUT_PAD = 128  # pad the 3-wide logits to a lane-dense 128-wide slab


def _selu(x):
    return SELU_SCALE * jnp.where(x > 0, x, SELU_ALPHA * (jnp.exp(x) - 1.0))


def mlp_head_kernel(x_ref, w1_ref, b1_ref, w2_ref, b2_ref, w3_ref, b3_ref, o_ref):
    """Fused 3-layer MLP head: (tm,256) -> (tm,128) -> (tm,64) -> (tm,128-padded)."""
    cdt = w1_ref.dtype  # compute dtype for the MXU (bf16 by default)
    x = x_ref[...].astype(cdt)
    h1 = _selu(
        jnp.dot(x, w1_ref[...], preferred_element_type=jnp.float32) + b1_ref[...]
    )
    h2 = _selu(
        jnp.dot(h1.astype(cdt), w2_ref[...], preferred_element_type=jnp.float32)
        + b2_ref[...]
    )
    o_ref[...] = (
        jnp.dot(h2.astype(cdt), w3_ref[...], preferred_element_type=jnp.float32)
        + b3_ref[...]
    )


def init_params(key):
    """Deterministic synthetic parameters in PyTorch Linear layout (out, in)."""
    ks = jax.random.split(key, 6)
    w1 = jax.random.normal(ks[0], (D_H1, D_IN), jnp.float32) * 0.05
    b1 = jax.random.normal(ks[1], (D_H1,), jnp.float32) * 0.05
    w2 = jax.random.normal(ks[2], (D_H2, D_H1), jnp.float32) * 0.05
    b2 = jax.random.normal(ks[3], (D_H2,), jnp.float32) * 0.05
    w3 = jax.random.normal(ks[4], (D_OUT, D_H2), jnp.float32) * 0.05
    b3 = jax.random.normal(ks[5], (D_OUT,), jnp.float32) * 0.05
    return {"w1": w1, "b1": b1, "w2": w2, "b2": b2, "w3": w3, "b3": b3}


def _choose_tm(m, tm_max):
    """Large row tile (amortize per-step overhead) but keep enough grid steps
    so v7x's two TensorCores both get work on the 'parallel' axis."""
    m8 = ((m + 7) // 8) * 8  # sublane-aligned row count
    if m8 <= tm_max:
        return m8  # everything fits in one tile
    tm = tm_max
    while tm > 256 and pl.cdiv(m8, tm) < 8:
        tm //= 2
    return tm


def resnet_classification_head(
    encoded,
    params,
    *,
    tm_max=1024,
    compute_dtype=jnp.bfloat16,
    return_padded=False,
):
    """encoded: (B, C, H, 256) -> logits (B, C, H, 3).

    If return_padded=True, returns the raw lane-dense (rows, 128) slab (first 3
    lanes are the logits) so a downstream consumer can fuse the un-pad.
    """
    lead_shape = encoded.shape[:-1]
    assert encoded.shape[-1] == D_IN
    x2d = encoded.reshape(-1, D_IN)  # bitcast-level reshape, no HBM pass
    m = x2d.shape[0]
    tm = _choose_tm(m, tm_max)
    grid = (pl.cdiv(m, tm),)

    # Pre-transpose to (in, out) in the compute dtype; pad the final layer to a
    # lane-dense 128-wide output.  Biases stay f32 (added post-accumulation).
    w1t = params["w1"].T.astype(compute_dtype)                       # (256, 128)
    b1 = params["b1"].reshape(1, D_H1).astype(jnp.float32)           # (1, 128)
    w2t = params["w2"].T.astype(compute_dtype)                       # (128, 64)
    b2 = params["b2"].reshape(1, D_H2).astype(jnp.float32)           # (1, 64)
    w3t = (
        jnp.zeros((D_H2, D_OUT_PAD), compute_dtype)
        .at[:, :D_OUT]
        .set(params["w3"].T.astype(compute_dtype))
    )
    b3 = (
        jnp.zeros((1, D_OUT_PAD), jnp.float32)
        .at[0, :D_OUT]
        .set(params["b3"].astype(jnp.float32))
    )

    out_pad = pl.pallas_call(
        mlp_head_kernel,
        out_shape=jax.ShapeDtypeStruct((m, D_OUT_PAD), jnp.float32),
        grid_spec=pltpu.PrefetchScalarGridSpec(
            num_scalar_prefetch=0,
            grid=grid,
            in_specs=[
                pl.BlockSpec((tm, D_IN), lambda i: (i, 0)),        # activations tile
                pl.BlockSpec((D_IN, D_H1), lambda i: (0, 0)),      # W1^T (resident)
                pl.BlockSpec((1, D_H1), lambda i: (0, 0)),         # b1
                pl.BlockSpec((D_H1, D_H2), lambda i: (0, 0)),      # W2^T
                pl.BlockSpec((1, D_H2), lambda i: (0, 0)),         # b2
                pl.BlockSpec((D_H2, D_OUT_PAD), lambda i: (0, 0)), # W3^T (padded)
                pl.BlockSpec((1, D_OUT_PAD), lambda i: (0, 0)),    # b3 (padded)
            ],
            out_specs=pl.BlockSpec((tm, D_OUT_PAD), lambda i: (i, 0)),
        ),
        compiler_params=pltpu.CompilerParams(dimension_semantics=("parallel",)),
    )(x2d, w1t, b1, w2t, b2, w3t, b3)

    if return_padded:
        return out_pad
    return out_pad[:, :D_OUT].reshape(*lead_shape, D_OUT)


def _reference(encoded, params, compute_dtype=jnp.float32):
    """Pure-JAX reference; compute_dtype mirrors the kernel's matmul dtype."""
    x = encoded.reshape(-1, D_IN)
    h1 = _selu(
        jnp.dot(x.astype(compute_dtype), params["w1"].T.astype(compute_dtype),
                preferred_element_type=jnp.float32)
        + params["b1"].astype(jnp.float32)
    )
    h2 = _selu(
        jnp.dot(h1.astype(compute_dtype), params["w2"].T.astype(compute_dtype),
                preferred_element_type=jnp.float32)
        + params["b2"].astype(jnp.float32)
    )
    out = (
        jnp.dot(h2.astype(compute_dtype), params["w3"].T.astype(compute_dtype),
                preferred_element_type=jnp.float32)
        + params["b3"].astype(jnp.float32)
    )
    return out.reshape(*encoded.shape[:-1], D_OUT)


if __name__ == "__main__":
    key = jax.random.PRNGKey(0)
    k_feat, k_param = jax.random.split(key)

    # Stand-in for ResNet_Backbone(batch['rgb0'], batch['vmap0']) output:
    # (B, C, H, 256) feature tensor with the Linear's in_features=256 last.
    encoded_live = jax.random.normal(k_feat, (2, 4, 8, D_IN), jnp.float32)
    params = init_params(k_param)

    out = resnet_classification_head(encoded_live, params)
    out = jax.block_until_ready(out)
    assert out.shape == (2, 4, 8, D_OUT)

    # Strict check against a bf16-matmul-matched reference.
    ref_bf16 = _reference(encoded_live, params, compute_dtype=jnp.bfloat16)
    assert jnp.allclose(out, ref_bf16, atol=1e-2, rtol=1e-2)

    # Looser check against the full-f32 PyTorch-equivalent reference.
    ref_f32 = _reference(encoded_live, params, compute_dtype=jnp.float32)
    assert jnp.allclose(out, ref_f32, atol=5e-2, rtol=5e-2)

    print("KERNEL_OK")
</pallas_src>

<mosaic_0001>
module attributes {stable_mosaic.version = 11 : i64} {
  func.func @mlp_head_kernel(%arg0: i32, %arg1: memref<64x256xf32, #tpu.memory_space<vmem>>, %arg2: memref<256x128xbf16, #tpu.memory_space<vmem>>, %arg3: memref<1x128xf32, #tpu.memory_space<vmem>>, %arg4: memref<128x64xbf16, #tpu.memory_space<vmem>>, %arg5: memref<1x64xf32, #tpu.memory_space<vmem>>, %arg6: memref<64x128xbf16, #tpu.memory_space<vmem>>, %arg7: memref<1x128xf32, #tpu.memory_space<vmem>>, %arg8: memref<64x128xf32, #tpu.memory_space<vmem>>) attributes {dimension_semantics = [#tpu.dimension_semantics<parallel>], iteration_bounds = array<i64: 1>, scalar_prefetch = 0 : i64, scratch_operands = 0 : i64, tpu.core_type = #tpu.core_type<tc>, window_params = [{transform_indices = @transform_0, window_bounds = array<i64: 64, 256>}, {pipeline_mode = #tpu.pipeline_mode<synchronous>, transform_indices = @transform_1, window_bounds = array<i64: 256, 128>}, {pipeline_mode = #tpu.pipeline_mode<synchronous>, transform_indices = @transform_2, window_bounds = array<i64: 1, 128>}, {pipeline_mode = #tpu.pipeline_mode<synchronous>, transform_indices = @transform_3, window_bounds = array<i64: 128, 64>}, {pipeline_mode = #tpu.pipeline_mode<synchronous>, transform_indices = @transform_4, window_bounds = array<i64: 1, 64>}, {pipeline_mode = #tpu.pipeline_mode<synchronous>, transform_indices = @transform_5, window_bounds = array<i64: 64, 128>}, {pipeline_mode = #tpu.pipeline_mode<synchronous>, transform_indices = @transform_6, window_bounds = array<i64: 1, 128>}, {transform_indices = @transform_7, window_bounds = array<i64: 64, 128>}]} {
    %c0 = arith.constant 0 : index
    %c0_0 = arith.constant 0 : index
    %0 = vector.load %arg1[%c0, %c0_0] : memref<64x256xf32, #tpu.memory_space<vmem>>, vector<64x256xf32>
    %1 = arith.truncf %0 : vector<64x256xf32> to vector<64x256xbf16>
    %c0_1 = arith.constant 0 : index
    %c0_2 = arith.constant 0 : index
    %2 = vector.load %arg2[%c0_1, %c0_2] : memref<256x128xbf16, #tpu.memory_space<vmem>>, vector<256x128xbf16>
    %cst = arith.constant dense<0.000000e+00> : vector<64x128xf32>
    %3 = tpu.matmul %1, %2, %cst {dimension_numbers = #tpu.dot_dimension_numbers<[1], [0], [0], [1], [0, 0, 1, 1], [], []>} : vector<64x256xbf16>, vector<256x128xbf16>, vector<64x128xf32> -> vector<64x128xf32>
    %c0_3 = arith.constant 0 : index
    %c0_4 = arith.constant 0 : index
    %4 = vector.load %arg3[%c0_3, %c0_4] : memref<1x128xf32, #tpu.memory_space<vmem>>, vector<1x128xf32>
    %5 = vector.broadcast %4 : vector<1x128xf32> to vector<64x128xf32>
    %6 = arith.addf %3, %5 : vector<64x128xf32>
    %cst_5 = arith.constant 0.000000e+00 : f32
    %7 = vector.broadcast %cst_5 : f32 to vector<64x128xf32>
    %8 = arith.cmpf ogt, %6, %7 : vector<64x128xf32>
    %9 = math.exp %6 : vector<64x128xf32>
    %cst_6 = arith.constant 1.000000e+00 : f32
    %10 = vector.broadcast %cst_6 : f32 to vector<64x128xf32>
    %11 = arith.subf %9, %10 : vector<64x128xf32>
    %cst_7 = arith.constant 1.67326319 : f32
    %12 = vector.broadcast %cst_7 : f32 to vector<64x128xf32>
    %13 = arith.mulf %12, %11 : vector<64x128xf32>
    %14 = arith.select %8, %6, %13 : vector<64x128xi1>, vector<64x128xf32>
    %cst_8 = arith.constant 1.05070102 : f32
    %15 = vector.broadcast %cst_8 : f32 to vector<64x128xf32>
    %16 = arith.mulf %15, %14 : vector<64x128xf32>
    %17 = arith.truncf %16 : vector<64x128xf32> to vector<64x128xbf16>
    %c0_9 = arith.constant 0 : index
    %c0_10 = arith.constant 0 : index
    %18 = vector.load %arg4[%c0_9, %c0_10] : memref<128x64xbf16, #tpu.memory_space<vmem>>, vector<128x64xbf16>
    %cst_11 = arith.constant dense<0.000000e+00> : vector<64x64xf32>
    %19 = tpu.matmul %17, %18, %cst_11 {dimension_numbers = #tpu.dot_dimension_numbers<[1], [0], [0], [1], [0, 0, 1, 1], [], []>} : vector<64x128xbf16>, vector<128x64xbf16>, vector<64x64xf32> -> vector<64x64xf32>
    %c0_12 = arith.constant 0 : index
    %c0_13 = arith.constant 0 : index
    %20 = vector.load %arg5[%c0_12, %c0_13] : memref<1x64xf32, #tpu.memory_space<vmem>>, vector<1x64xf32>
    %21 = vector.broadcast %20 : vector<1x64xf32> to vector<64x64xf32>
    %22 = arith.addf %19, %21 : vector<64x64xf32>
    %cst_14 = arith.constant 0.000000e+00 : f32
    %23 = vector.broadcast %cst_14 : f32 to vector<64x64xf32>
    %24 = arith.cmpf ogt, %22, %23 : vector<64x64xf32>
    %25 = math.exp %22 : vector<64x64xf32>
    %cst_15 = arith.constant 1.000000e+00 : f32
    %26 = vector.broadcast %cst_15 : f32 to vector<64x64xf32>
    %27 = arith.subf %25, %26 : vector<64x64xf32>
    %cst_16 = arith.constant 1.67326319 : f32
    %28 = vector.broadcast %cst_16 : f32 to vector<64x64xf32>
    %29 = arith.mulf %28, %27 : vector<64x64xf32>
    %30 = arith.select %24, %22, %29 : vector<64x64xi1>, vector<64x64xf32>
    %cst_17 = arith.constant 1.05070102 : f32
    %31 = vector.broadcast %cst_17 : f32 to vector<64x64xf32>
    %32 = arith.mulf %31, %30 : vector<64x64xf32>
    %33 = arith.truncf %32 : vector<64x64xf32> to vector<64x64xbf16>
    %c0_18 = arith.constant 0 : index
    %c0_19 = arith.constant 0 : index
    %34 = vector.load %arg6[%c0_18, %c0_19] : memref<64x128xbf16, #tpu.memory_space<vmem>>, vector<64x128xbf16>
    %cst_20 = arith.constant dense<0.000000e+00> : vector<64x128xf32>
    %35 = tpu.matmul %33, %34, %cst_20 {dimension_numbers = #tpu.dot_dimension_numbers<[1], [0], [0], [1], [0, 0, 1, 1], [], []>} : vector<64x64xbf16>, vector<64x128xbf16>, vector<64x128xf32> -> vector<64x128xf32>
    %c0_21 = arith.constant 0 : index
    %c0_22 = arith.constant 0 : index
    %36 = vector.load %arg7[%c0_21, %c0_22] : memref<1x128xf32, #tpu.memory_space<vmem>>, vector<1x128xf32>
    %37 = vector.broadcast %36 : vector<1x128xf32> to vector<64x128xf32>
    %38 = arith.addf %35, %37 : vector<64x128xf32>
    %c0_23 = arith.constant 0 : index
    %c0_24 = arith.constant 0 : index
    %39 = vector.load %arg8[%c0_23, %c0_24] : memref<64x128xf32, #tpu.memory_space<vmem>>, vector<64x128xf32>
    tpu.vector_store %arg8[%c0_23, %c0_24], %38 {strides = array<i32>} : memref<64x128xf32, #tpu.memory_space<vmem>>, vector<64x128xf32>,
    return
  }
  func.func @transform_0(%arg0: i32) -> (i32, i32) {
    %c0_i32 = arith.constant 0 : i32
    %c0_i32_0 = arith.constant 0 : i32
    return %arg0, %c0_i32 : i32, i32
  }
  func.func @transform_1(%arg0: i32) -> (i32, i32) {
    %c0_i32 = arith.constant 0 : i32
    %c0_i32_0 = arith.constant 0 : i32
    %c0_i32_1 = arith.constant 0 : i32
    return %c0_i32, %c0_i32_0 : i32, i32
  }
  func.func @transform_2(%arg0: i32) -> (i32, i32) {
    %c0_i32 = arith.constant 0 : i32
    %c0_i32_0 = arith.constant 0 : i32
    %c0_i32_1 = arith.constant 0 : i32
    return %c0_i32, %c0_i32_0 : i32, i32
  }
  func.func @transform_3(%arg0: i32) -> (i32, i32) {
    %c0_i32 = arith.constant 0 : i32
    %c0_i32_0 = arith.constant 0 : i32
    %c0_i32_1 = arith.constant 0 : i32
    return %c0_i32, %c0_i32_0 : i32, i32
  }
  func.func @transform_4(%arg0: i32) -> (i32, i32) {
    %c0_i32 = arith.constant 0 : i32
    %c0_i32_0 = arith.constant 0 : i32
    %c0_i32_1 = arith.constant 0 : i32
    return %c0_i32, %c0_i32_0 : i32, i32
  }
  func.func @transform_5(%arg0: i32) -> (i32, i32) {
    %c0_i32 = arith.constant 0 : i32
    %c0_i32_0 = arith.constant 0 : i32
    %c0_i32_1 = arith.constant 0 : i32
    return %c0_i32, %c0_i32_0 : i32, i32
  }
  func.func @transform_6(%arg0: i32) -> (i32, i32) {
    %c0_i32 = arith.constant 0 : i32
    %c0_i32_0 = arith.constant 0 : i32
    %c0_i32_1 = arith.constant 0 : i32
    return %c0_i32, %c0_i32_0 : i32, i32
  }
  func.func @transform_7(%arg0: i32) -> (i32, i32) {
    %c0_i32 = arith.constant 0 : i32
    %c0_i32_0 = arith.constant 0 : i32
    return %arg0, %c0_i32 : i32, i32
  }
}

</mosaic_0001>

<llo_original>
// kernel: tpu_custom_call.1
$region0: #{tpu_custom_call.1}
  #allocation0 [shape = 'u32[]', space=smem, size = 0x4, offset = 0x4, fixed_abs, tag = 'smem constant byte address 0x4 - core index']
  #allocation1 [shape = 'u32[144,128]{1,0:T(1,128)}', space=vmem, size = 0x12000, scoped, tag = 'internal scratch']
  %s0 = inlined_call_operand.hbm [shape: f32[64,256], index: 0, kind: input, shape index: {}]
  %s1 = inlined_call_operand.hbm [shape: bf16[256,128], index: 1, kind: input, shape index: {}]
  %s2 = inlined_call_operand.vmem [shape: f32[1,128], index: 2, kind: input, shape index: {}]
  %s3 = inlined_call_operand.vmem [shape: bf16[128,64], index: 3, kind: input, shape index: {}]
  %s4 = inlined_call_operand.vmem [shape: f32[1,64], index: 4, kind: input, shape index: {}]
  %s5 = inlined_call_operand.vmem [shape: bf16[64,128], index: 5, kind: input, shape index: {}]
  %s6 = inlined_call_operand.vmem [shape: f32[1,128], index: 6, kind: input, shape index: {}]
  %s7 = inlined_call_operand.hbm [shape: f32[64,128], index: 7, kind: output, shape index: {}]
  %s8 = sld [smem:[#allocation0]]
  $region46: #{tpu_custom_call.1} parent=0
    _
  %s10 = ssub.s32 1, %s8
  %s11 = scalar_select 0, %s10, %s8
  $region1: #{tpu_custom_call.1} parent=0
    #allocation2 [shape = 'u8[65536]{0}', space=vmem, size = 0x10000, scoped, tag = 'input window, operand 0, single buffered']
    #allocation3 [shape = 's32[1]{0}', space=sflag, size = 0x4, scoped, tag = 'scoped memory for tpu_custom_call.1']
    #allocation4 [shape = 's32[1]{0}', space=sflag, size = 0x4, scoped, tag = 'scoped memory for tpu_custom_call.1']
    #allocation5 [shape = 'u8[65536]{0}', space=vmem, size = 0x10000, scoped, tag = 'input window, operand 1, single buffered']
    #allocation6 [shape = 's32[1]{0}', space=sflag, size = 0x4, scoped, tag = 'scoped memory for tpu_custom_call.1']
    #allocation7 [shape = 'u8[32768]{0}', space=vmem, size = 0x8000, scoped, tag = 'output window, operand 0, single buffered']
    %12 = vsyncpa [#allocation3], 0
    %13 = vsyncpa [#allocation6], 0
    %14 = vsyncpa [#allocation4], 0
    // Predicated region
    $region2: #{tpu_custom_call.1} parent=1 // pred_check
      _
    $region3: #{tpu_custom_call.1} parent=1 // pred_check_branch
      %16 = sbr.rel (0) target = $region5
    $region4: #{tpu_custom_call.1} parent=1 // pred_region
      %s18 = ssub.s32 2048, 2048
      %19 = vsyncadd [#allocation3], %s18
      %s20 = sshll.u32 [#allocation2], 4
      %s21 = int_to_ptr.vmem [resolvable:$true] %s20
      %26 = dma.hbm_to_vmem [thread:$0]  %s0, 2048, %s21, [#allocation3], 256, 256, 16
    $region5: #{tpu_custom_call.1} parent=1 // pred_fallthru
      _
    // Predicated region
    $region6: #{tpu_custom_call.1} parent=1 // pred_check
      _
    $region7: #{tpu_custom_call.1} parent=1 // pred_check_branch
      %28 = sbr.rel (0) target = $region9
    $region8: #{tpu_custom_call.1} parent=1 // pred_region
      %s30 = ssub.s32 2048, 2048
      %31 = vsyncadd [#allocation6], %s30
      %s32 = sshll.u32 [#allocation5], 4
      %s33 = int_to_ptr.vmem [resolvable:$true] %s32
      %38 = dma.hbm_to_vmem [thread:$0]  %s1, 2048, %s33, [#allocation6], 64, 64, 4
    $region9: #{tpu_custom_call.1} parent=1 // pred_fallthru
      _
    // Predicated region
    $region10: #{tpu_custom_call.1} parent=1 // pred_check
      _
    $region11: #{tpu_custom_call.1} parent=1 // pred_check_branch
      %40 = sbr.rel (0) target = $region13
    $region12: #{tpu_custom_call.1} parent=1 // pred_region
      _
    $region13: #{tpu_custom_call.1} parent=1 // pred_fallthru
      _
    // Predicated region
    $region14: #{tpu_custom_call.1} parent=1 // pred_check
      _
    $region15: #{tpu_custom_call.1} parent=1 // pred_check_branch
      %42 = sbr.rel (0) target = $region17
    $region16: #{tpu_custom_call.1} parent=1 // pred_region
      _
    $region17: #{tpu_custom_call.1} parent=1 // pred_fallthru
      _
    // Predicated region
    $region18: #{tpu_custom_call.1} parent=1 // pred_check
      _
    $region19: #{tpu_custom_call.1} parent=1 // pred_check_branch
      %44 = sbr.rel (0) target = $region21
    $region20: #{tpu_custom_call.1} parent=1 // pred_region
      _
    $region21: #{tpu_custom_call.1} parent=1 // pred_fallthru
      _
    // Predicated region
    $region22: #{tpu_custom_call.1} parent=1 // pred_check
      _
    $region23: #{tpu_custom_call.1} parent=1 // pred_check_branch
      %46 = sbr.rel (0) target = $region25
    $region24: #{tpu_custom_call.1} parent=1 // pred_region
      _
    $region25: #{tpu_custom_call.1} parent=1 // pred_fallthru
      _
    // Predicated region
    $region26: #{tpu_custom_call.1} parent=1 // pred_check
      _
    $region27: #{tpu_custom_call.1} parent=1 // pred_check_branch
      %48 = sbr.rel (0) target = $region29
    $region28: #{tpu_custom_call.1} parent=1 // pred_region
      _
    $region29: #{tpu_custom_call.1} parent=1 // pred_fallthru
      _
    // Predicated region
    $region30: #{tpu_custom_call.1} parent=1 // pred_check
      _
    $region31: #{tpu_custom_call.1} parent=1 // pred_check_branch
      %50 = sbr.rel (0) target = $region33
    $region32: #{tpu_custom_call.1} parent=1 // pred_region
      %51 = dma.done [#allocation3], 2048
    $region33: #{tpu_custom_call.1} parent=1 // pred_fallthru
      _
    // Predicated region
    $region34: #{tpu_custom_call.1} parent=1 // pred_check
      _
    $region35: #{tpu_custom_call.1} parent=1 // pred_check_branch
      %53 = sbr.rel (0) target = $region37
    $region36: #{tpu_custom_call.1} parent=1 // pred_region
      %54 = dma.done [#allocation6], 2048
    $region37: #{tpu_custom_call.1} parent=1 // pred_fallthru
      _
    %v56 = vld [vmem:[#allocation2] sm:$0xff]
    %v57 = vld [vmem:[#allocation2 + $0x8] sm:$0xff]
    %v58 = vld [vmem:[#allocation2 + $0x10] sm:$0xff]
    %v59 = vld [vmem:[#allocation2 + $0x18] sm:$0xff]
    %v60 = vld [vmem:[#allocation2 + $0x20] sm:$0xff]
    %v61 = vld [vmem:[#allocation2 + $0x28] sm:$0xff]
    %v62 = vld [vmem:[#allocation2 + $0x30] sm:$0xff]
    %v63 = vld [vmem:[#allocation2 + $0x38] sm:$0xff]
    %v64 = vld [vmem:[#allocation2 + $0x40] sm:$0xff]
    %v65 = vld [vmem:[#allocation2 + $0x48] sm:$0xff]
    %v66 = vld [vmem:[#allocation2 + $0x50] sm:$0xff]
    %v67 = vld [vmem:[#allocation2 + $0x58] sm:$0xff]
    %v68 = vld [vmem:[#allocation2 + $0x60] sm:$0xff]
    %v69 = vld [vmem:[#allocation2 + $0x68] sm:$0xff]
    %v70 = vld [vmem:[#allocation2 + $0x70] sm:$0xff]
    %v71 = vld [vmem:[#allocation2 + $0x78] sm:$0xff]
    %v72 = vpack.c.bf16 %v58, %v56
    %v73 = vpack.c.bf16 %v59, %v57
    %v74 = vpack.c.bf16 %v62, %v60
    %v75 = vpack.c.bf16 %v63, %v61
    %v76 = vpack.c.bf16 %v66, %v64
    %v77 = vpack.c.bf16 %v67, %v65
    %v78 = vpack.c.bf16 %v70, %v68
    %v79 = vpack.c.bf16 %v71, %v69
    %v80 = vld [vmem:[#allocation5] sm:$0xf]
    %v81 = vld [vmem:[#allocation5 + $0x4] sm:$0xf]
    %v82 = vld [vmem:[#allocation5 + $0x8] sm:$0xf]
    %v83 = vld [vmem:[#allocation5 + $0xc] sm:$0xf]
    %v84 = vld [vmem:[#allocation5 + $0x10] sm:$0xf]
    %v85 = vld [vmem:[#allocation5 + $0x14] sm:$0xf]
    %v86 = vld [vmem:[#allocation5 + $0x18] sm:$0xf]
    %v87 = vld [vmem:[#allocation5 + $0x1c] sm:$0xf]
    %v88 = vld [vmem:[#allocation5 + $0x20] sm:$0xf]
    %v89 = vld [vmem:[#allocation5 + $0x24] sm:$0xf]
    %v90 = vld [vmem:[#allocation5 + $0x28] sm:$0xf]
    %v91 = vld [vmem:[#allocation5 + $0x2c] sm:$0xf]
    %v92 = vld [vmem:[#allocation5 + $0x30] sm:$0xf]
    %v93 = vld [vmem:[#allocation5 + $0x34] sm:$0xf]
    %v94 = vld [vmem:[#allocation5 + $0x38] sm:$0xf]
    %v95 = vld [vmem:[#allocation5 + $0x3c] sm:$0xf]
    %v96 = vld [vmem:[#allocation5 + $0x40] sm:$0xf]
    %v97 = vld [vmem:[#allocation5 + $0x44] sm:$0xf]
    %v98 = vld [vmem:[#allocation5 + $0x48] sm:$0xf]
    %v99 = vld [vmem:[#allocation5 + $0x4c] sm:$0xf]
    %v100 = vld [vmem:[#allocation5 + $0x50] sm:$0xf]
    %v101 = vld [vmem:[#allocation5 + $0x54] sm:$0xf]
    %v102 = vld [vmem:[#allocation5 + $0x58] sm:$0xf]
    %v103 = vld [vmem:[#allocation5 + $0x5c] sm:$0xf]
    %v104 = vld [vmem:[#allocation5 + $0x60] sm:$0xf]
    %v105 = vld [vmem:[#allocation5 + $0x64] sm:$0xf]
    %v106 = vld [vmem:[#allocation5 + $0x68] sm:$0xf]
    %v107 = vld [vmem:[#allocation5 + $0x6c] sm:$0xf]
    %v108 = vld [vmem:[#allocation5 + $0x70] sm:$0xf]
    %v109 = vld [vmem:[#allocation5 + $0x74] sm:$0xf]
    %v110 = vld [vmem:[#allocation5 + $0x78] sm:$0xf]
    %v111 = vld [vmem:[#allocation5 + $0x7c] sm:$0xf]
    %v112 = vld [vmem:[%s2] sm:$0x1]
    %v114 = vlaneseq
    %v115 = vshrl.u32 %v114, 7
    %v116 = vsub.s32 0, %v115
    %v117 = vrot.slane %v112, %v116
    %v151 = vunpack.c.l.b16 %v80
    %v152 = vunpack.c.l.b16 %v81
    %v153 = vunpack.c.l.b16 %v82
    %v154 = vunpack.c.l.b16 %v83
    %v155 = vunpack.c.l.b16 %v84
    %v156 = vunpack.c.l.b16 %v85
    %v157 = vunpack.c.l.b16 %v86
    %v158 = vunpack.c.l.b16 %v87
    %v159 = vunpack.c.l.b16 %v88
    %v160 = vunpack.c.l.b16 %v89
    %v161 = vunpack.c.l.b16 %v90
    %v162 = vunpack.c.l.b16 %v91
    %v163 = vunpack.c.l.b16 %v92
    %v164 = vunpack.c.l.b16 %v93
    %v165 = vunpack.c.l.b16 %v94
    %v166 = vunpack.c.l.b16 %v95
    %v167 = vunpack.c.l.b16 %v96
    %v168 = vunpack.c.l.b16 %v97
    %v169 = vunpack.c.l.b16 %v98
    %v170 = vunpack.c.l.b16 %v99
    %v171 = vunpack.c.l.b16 %v100
    %v172 = vunpack.c.l.b16 %v101
    %v173 = vunpack.c.l.b16 %v102
    %v174 = vunpack.c.l.b16 %v103
    %v175 = vunpack.c.l.b16 %v104
    %v176 = vunpack.c.l.b16 %v105
    %v177 = vunpack.c.l.b16 %v106
    %v178 = vunpack.c.l.b16 %v107
    %v179 = vunpack.c.l.b16 %v108
    %v180 = vunpack.c.l.b16 %v109
    %v181 = vunpack.c.l.b16 %v110
    %v182 = vunpack.c.l.b16 %v111
    %v183 = vpack.c.b16 %v152, %v151
    %v184 = vpack.c.b16 %v154, %v153
    %v185 = vpack.c.b16 %v156, %v155
    %v186 = vpack.c.b16 %v158, %v157
    %v187 = vpack.c.b16 %v160, %v159
    %v188 = vpack.c.b16 %v162, %v161
    %v189 = vpack.c.b16 %v164, %v163
    %v190 = vpack.c.b16 %v166, %v165
    %v191 = vpack.c.b16 %v168, %v167
    %v192 = vpack.c.b16 %v170, %v169
    %v193 = vpack.c.b16 %v172, %v171
    %v194 = vpack.c.b16 %v174, %v173
    %v195 = vpack.c.b16 %v176, %v175
    %v196 = vpack.c.b16 %v178, %v177
    %v197 = vpack.c.b16 %v180, %v179
    %v198 = vpack.c.b16 %v182, %v181
    %215 = vmatprep.subr.bf16.mxu0 0
    %216 = vmatpush1.bf16.msra.mxu0 %v190
    %217 = vmatprep.subr.bf16.mxu0 0
    %218 = vmatpush1.bf16.msra.mxu0 %v189
    %219 = vmatprep.subr.bf16.mxu0 0
    %220 = vmatpush1.bf16.msra.mxu0 %v188
    %221 = vmatprep.subr.bf16.mxu0 0
    %222 = vmatpush1.bf16.msra.mxu0 %v187
    %223 = vmatprep.subr.bf16.mxu0 0
    %224 = vmatpush1.bf16.msra.mxu0 %v186
    %225 = vmatprep.subr.bf16.mxu0 0
    %226 = vmatpush1.bf16.msra.mxu0 %v185
    %227 = vmatprep.subr.bf16.mxu0 0
    %228 = vmatpush1.bf16.msra.mxu0 %v184
    %229 = vmatprep.subr.bf16.mxu0 0
    %230 = vmatpush1.bf16.msra.mxu0 %v183
    %231 = vmatprep.subr.bf16.mxu0 0
    %232 = vmatpush2.bf16.msra.mxu0 %v198
    %233 = vmatprep.subr.bf16.mxu0 0
    %234 = vmatpush2.bf16.msra.mxu0 %v197
    %235 = vmatprep.subr.bf16.mxu0 0
    %236 = vmatpush2.bf16.msra.mxu0 %v196
    %237 = vmatprep.subr.bf16.mxu0 0
    %238 = vmatpush2.bf16.msra.mxu0 %v195
    %239 = vmatprep.subr.bf16.mxu0 0
    %240 = vmatpush2.bf16.msra.mxu0 %v194
    %241 = vmatprep.subr.bf16.mxu0 0
    %242 = vmatpush2.bf16.msra.mxu0 %v193
    %243 = vmatprep.subr.bf16.mxu0 0
    %244 = vmatpush2.bf16.msra.mxu0 %v192
    %245 = vmatprep.subr.bf16.mxu0 0
    %246 = vmatpush2.bf16.msra.mxu0 %v191
    %247 = vmatprep.mubr.bf16.mxu0 %v73
    %248 = vmatmul.mubr.bf16.gmra.mxu0 %v72
    %v249 = vpop.f32.mrf.mxu0
    %v250 = vadd.f32 %v117, %v249
    %v251 = vpop.f32.mrf.mxu0
    %v252 = vpop.f32.mrf.mxu0
    %v253 = vadd.f32 %v117, %v252
    %v254 = vpop.f32.mrf.mxu0
    %255 = vmatprep.mubr.bf16.mxu0 %v75
    %256 = vmatmul.mubr.bf16.gmra.mxu0 %v74
    %v257 = vpop.f32.mrf.mxu0
    %v258 = vadd.f32 %v117, %v257
    %v259 = vpop.f32.mrf.mxu0
    %v260 = vpop.f32.mrf.mxu0
    %v261 = vadd.f32 %v117, %v260
    %v262 = vpop.f32.mrf.mxu0
    %263 = vmatprep.mubr.bf16.mxu0 %v77
    %264 = vmatmul.mubr.bf16.gmra.mxu0 %v76
    %v265 = vpop.f32.mrf.mxu0
    %v266 = vadd.f32 %v117, %v265
    %v267 = vpop.f32.mrf.mxu0
    %v268 = vpop.f32.mrf.mxu0
    %v269 = vadd.f32 %v117, %v268
    %v270 = vpop.f32.mrf.mxu0
    %271 = vmatprep.mubr.bf16.mxu0 %v79
    %272 = vmatmul.mubr.bf16.gmra.mxu0 %v78
    %v273 = vpop.f32.mrf.mxu0
    %v274 = vadd.f32 %v117, %v273
    %v275 = vpop.f32.mrf.mxu0
    %v276 = vpop.f32.mrf.mxu0
    %v277 = vadd.f32 %v117, %v276
    %v278 = vpop.f32.mrf.mxu0
    %279 = vdwg.mxu0
    %vm280 = vcmp.gt.f32.partialorder %v250, 0.0
    %vm281 = vcmp.gt.f32.partialorder %v253, 0.0
    %vm282 = vcmp.gt.f32.partialorder %v258, 0.0
    %vm283 = vcmp.gt.f32.partialorder %v261, 0.0
    %vm284 = vcmp.gt.f32.partialorder %v266, 0.0
    %vm285 = vcmp.gt.f32.partialorder %v269, 0.0
    %vm286 = vcmp.gt.f32.partialorder %v274, 0.0
    %vm287 = vcmp.gt.f32.partialorder %v277, 0.0
    %v288 = vmul.f32 %v250, 1.442695
    %v289 = vpow.pop %v288
    %v290 = vmul.f32 %v253, 1.442695
    %v291 = vpow.pop %v290
    %v292 = vmul.f32 %v258, 1.442695
    %v293 = vpow.pop %v292
    %v294 = vmul.f32 %v261, 1.442695
    %v295 = vpow.pop %v294
    %v296 = vmul.f32 %v266, 1.442695
    %v297 = vpow.pop %v296
    %v298 = vmul.f32 %v269, 1.442695
    %v299 = vpow.pop %v298
    %v300 = vmul.f32 %v274, 1.442695
    %v301 = vpow.pop %v300
    %v302 = vmul.f32 %v277, 1.442695
    %v303 = vpow.pop %v302
    %v304 = vsub.f32 %v289, 1.0
    %v305 = vsub.f32 %v291, 1.0
    %v306 = vsub.f32 %v293, 1.0
    %v307 = vsub.f32 %v295, 1.0
    %v308 = vsub.f32 %v297, 1.0
    %v309 = vsub.f32 %v299, 1.0
    %v310 = vsub.f32 %v301, 1.0
    %v311 = vsub.f32 %v303, 1.0
    %v312 = vmul.f32 %v304, 1.6732632
    %v313 = vmul.f32 %v305, 1.6732632
    %v314 = vmul.f32 %v306, 1.6732632
    %v315 = vmul.f32 %v307, 1.6732632
    %v316 = vmul.f32 %v308, 1.6732632
    %v317 = vmul.f32 %v309, 1.6732632
    %v318 = vmul.f32 %v310, 1.6732632
    %v319 = vmul.f32 %v311, 1.6732632
    %v320 = vsel %vm280, %v250, %v312
    %v321 = vsel %vm281, %v253, %v313
    %v322 = vsel %vm282, %v258, %v314
    %v323 = vsel %vm283, %v261, %v315
    %v324 = vsel %vm284, %v266, %v316
    %v325 = vsel %vm285, %v269, %v317
    %v326 = vsel %vm286, %v274, %v318
    %v327 = vsel %vm287, %v277, %v319
    %v328 = vmul.f32 %v320, 1.050701
    %v329 = vmul.f32 %v321, 1.050701
    %v330 = vmul.f32 %v322, 1.050701
    %v331 = vmul.f32 %v323, 1.050701
    %v332 = vmul.f32 %v324, 1.050701
    %v333 = vmul.f32 %v325, 1.050701
    %v334 = vmul.f32 %v326, 1.050701
    %v335 = vmul.f32 %v327, 1.050701
    %v336 = vpack.c.bf16 %v329, %v328
    %v337 = vpack.c.bf16 %v331, %v330
    %v338 = vpack.c.bf16 %v333, %v332
    %v339 = vpack.c.bf16 %v335, %v334
    %v340 = vld [vmem:[%s3] sm:$0xf]
    %v341 = vld [vmem:[%s3 + $0x4] sm:$0xf]
    %v342 = vld [vmem:[%s3 + $0x8] sm:$0xf]
    %v343 = vld [vmem:[%s3 + $0xc] sm:$0xf]
    %v344 = vld [vmem:[%s3 + $0x10] sm:$0xf]
    %v345 = vld [vmem:[%s3 + $0x14] sm:$0xf]
    %v346 = vld [vmem:[%s3 + $0x18] sm:$0xf]
    %v347 = vld [vmem:[%s3 + $0x1c] sm:$0xf]
    %v348 = vld [vmem:[%s3 + $0x20] sm:$0xf]
    %v349 = vld [vmem:[%s3 + $0x24] sm:$0xf]
    %v350 = vld [vmem:[%s3 + $0x28] sm:$0xf]
    %v351 = vld [vmem:[%s3 + $0x2c] sm:$0xf]
    %v352 = vld [vmem:[%s3 + $0x30] sm:$0xf]
    %v353 = vld [vmem:[%s3 + $0x34] sm:$0xf]
    %v354 = vld [vmem:[%s3 + $0x38] sm:$0xf]
    %v355 = vld [vmem:[%s3 + $0x3c] sm:$0xf]
    %v356 = vld [vmem:[%s4] sm:$0x1]
    %v358 = vlaneseq
    %v359 = vshrl.u32 %v358, 7
    %v360 = vsub.s32 0, %v359
    %v361 = vrot.slane %v356, %v360
    %v379 = vunpack.c.l.b16 %v340
    %v380 = vunpack.c.l.b16 %v341
    %v381 = vunpack.c.l.b16 %v342
    %v382 = vunpack.c.l.b16 %v343
    %v383 = vunpack.c.l.b16 %v344
    %v384 = vunpack.c.l.b16 %v345
    %v385 = vunpack.c.l.b16 %v346
    %v386 = vunpack.c.l.b16 %v347
    %v387 = vunpack.c.l.b16 %v348
    %v388 = vunpack.c.l.b16 %v349
    %v389 = vunpack.c.l.b16 %v350
    %v390 = vunpack.c.l.b16 %v351
    %v391 = vunpack.c.l.b16 %v352
    %v392 = vunpack.c.l.b16 %v353
    %v393 = vunpack.c.l.b16 %v354
    %v394 = vunpack.c.l.b16 %v355
    %v395 = vpack.c.b16 %v380, %v379
    %v396 = vpack.c.b16 %v382, %v381
    %v397 = vpack.c.b16 %v384, %v383
    %v398 = vpack.c.b16 %v386, %v385
    %v399 = vpack.c.b16 %v388, %v387
    %v400 = vpack.c.b16 %v390, %v389
    %v401 = vpack.c.b16 %v392, %v391
    %v402 = vpack.c.b16 %v394, %v393
    %411 = vmatprep.subr.bf16.mxu0 0
    %412 = vmatpush1.bf16.msra.mxu0 %v402
    %413 = vmatprep.subr.bf16.mxu0 0
    %414 = vmatpush1.bf16.msra.mxu0 %v401
    %415 = vmatprep.subr.bf16.mxu0 0
    %416 = vmatpush1.bf16.msra.mxu0 %v400
    %417 = vmatprep.subr.bf16.mxu0 0
    %418 = vmatpush1.bf16.msra.mxu0 %v399
    %419 = vmatprep.subr.bf16.mxu0 0
    %420 = vmatpush1.bf16.msra.mxu0 %v398
    %421 = vmatprep.subr.bf16.mxu0 0
    %422 = vmatpush1.bf16.msra.mxu0 %v397
    %423 = vmatprep.subr.bf16.mxu0 0
    %424 = vmatpush1.bf16.msra.mxu0 %v396
    %425 = vmatprep.subr.bf16.mxu0 0
    %426 = vmatpush1.bf16.msra.mxu0 %v395
    %427 = vmatprep.subr.bf16.mxu0 0
    %428 = vmatpush2.bf16.msra.mxu0 0
    %429 = vmatprep.subr.bf16.mxu0 0
    %430 = vmatpush2.bf16.msra.mxu0 0
    %431 = vmatprep.subr.bf16.mxu0 0
    %432 = vmatpush2.bf16.msra.mxu0 0
    %433 = vmatprep.subr.bf16.mxu0 0
    %434 = vmatpush2.bf16.msra.mxu0 0
    %435 = vmatprep.subr.bf16.mxu0 0
    %436 = vmatpush2.bf16.msra.mxu0 0
    %437 = vmatprep.subr.bf16.mxu0 0
    %438 = vmatpush2.bf16.msra.mxu0 0
    %439 = vmatprep.subr.bf16.mxu0 0
    %440 = vmatpush2.bf16.msra.mxu0 0
    %441 = vmatprep.subr.bf16.mxu0 0
    %442 = vmatpush2.bf16.msra.mxu0 0
    %443 = vmatprep.mubr.bf16.mxu0 0
    %444 = vmatmul.mubr.bf16.gmra.mxu0 %v336
    %v445 = vpop.f32.mrf.mxu0
    %v446 = vadd.f32 %v361, %v445
    %v447 = vpop.f32.mrf.mxu0
    %v448 = vpop.f32.mrf.mxu0
    %v449 = vadd.f32 %v361, %v448
    %v450 = vpop.f32.mrf.mxu0
    %451 = vmatprep.mubr.bf16.mxu0 0
    %452 = vmatmul.mubr.bf16.gmra.mxu0 %v337
    %v453 = vpop.f32.mrf.mxu0
    %v454 = vadd.f32 %v361, %v453
    %v455 = vpop.f32.mrf.mxu0
    %v456 = vpop.f32.mrf.mxu0
    %v457 = vadd.f32 %v361, %v456
    %v458 = vpop.f32.mrf.mxu0
    %459 = vmatprep.mubr.bf16.mxu0 0
    %460 = vmatmul.mubr.bf16.gmra.mxu0 %v338
    %v461 = vpop.f32.mrf.mxu0
    %v462 = vadd.f32 %v361, %v461
    %v463 = vpop.f32.mrf.mxu0
    %v464 = vpop.f32.mrf.mxu0
    %v465 = vadd.f32 %v361, %v464
    %v466 = vpop.f32.mrf.mxu0
    %467 = vmatprep.mubr.bf16.mxu0 0
    %468 = vmatmul.mubr.bf16.gmra.mxu0 %v339
    %v469 = vpop.f32.mrf.mxu0
    %v470 = vadd.f32 %v361, %v469
    %v471 = vpop.f32.mrf.mxu0
    %v472 = vpop.f32.mrf.mxu0
    %v473 = vadd.f32 %v361, %v472
    %v474 = vpop.f32.mrf.mxu0
    %475 = vdwg.mxu0
    %vm476 = vcmp.gt.f32.partialorder %v446, 0.0
    %vm477 = vcmp.gt.f32.partialorder %v449, 0.0
    %vm478 = vcmp.gt.f32.partialorder %v454, 0.0
    %vm479 = vcmp.gt.f32.partialorder %v457, 0.0
    %vm480 = vcmp.gt.f32.partialorder %v462, 0.0
    %vm481 = vcmp.gt.f32.partialorder %v465, 0.0
    %vm482 = vcmp.gt.f32.partialorder %v470, 0.0
    %vm483 = vcmp.gt.f32.partialorder %v473, 0.0
    %v484 = vmul.f32 %v446, 1.442695
    %v485 = vpow.pop %v484
    %v486 = vmul.f32 %v449, 1.442695
    %v487 = vpow.pop %v486
    %v488 = vmul.f32 %v454, 1.442695
    %v489 = vpow.pop %v488
    %v490 = vmul.f32 %v457, 1.442695
    %v491 = vpow.pop %v490
    %v492 = vmul.f32 %v462, 1.442695
    %v493 = vpow.pop %v492
    %v494 = vmul.f32 %v465, 1.442695
    %v495 = vpow.pop %v494
    %v496 = vmul.f32 %v470, 1.442695
    %v497 = vpow.pop %v496
    %v498 = vmul.f32 %v473, 1.442695
    %v499 = vpow.pop %v498
    %v500 = vsub.f32 %v485, 1.0
    %v501 = vsub.f32 %v487, 1.0
    %v502 = vsub.f32 %v489, 1.0
    %v503 = vsub.f32 %v491, 1.0
    %v504 = vsub.f32 %v493, 1.0
    %v505 = vsub.f32 %v495, 1.0
    %v506 = vsub.f32 %v497, 1.0
    %v507 = vsub.f32 %v499, 1.0
    %v508 = vmul.f32 %v500, 1.6732632
    %v509 = vmul.f32 %v501, 1.6732632
    %v510 = vmul.f32 %v502, 1.6732632
    %v511 = vmul.f32 %v503, 1.6732632
    %v512 = vmul.f32 %v504, 1.6732632
    %v513 = vmul.f32 %v505, 1.6732632
    %v514 = vmul.f32 %v506, 1.6732632
    %v515 = vmul.f32 %v507, 1.6732632
    %v516 = vsel %vm476, %v446, %v508
    %v517 = vsel %vm477, %v449, %v509
    %v518 = vsel %vm478, %v454, %v510
    %v519 = vsel %vm479, %v457, %v511
    %v520 = vsel %vm480, %v462, %v512
    %v521 = vsel %vm481, %v465, %v513
    %v522 = vsel %vm482, %v470, %v514
    %v523 = vsel %vm483, %v473, %v515
    %v524 = vmul.f32 %v516, 1.050701
    %v525 = vmul.f32 %v517, 1.050701
    %v526 = vmul.f32 %v518, 1.050701
    %v527 = vmul.f32 %v519, 1.050701
    %v528 = vmul.f32 %v520, 1.050701
    %v529 = vmul.f32 %v521, 1.050701
    %v530 = vmul.f32 %v522, 1.050701
    %v531 = vmul.f32 %v523, 1.050701
    %v532 = vpack.c.bf16 %v525, %v524
    %v533 = vpack.c.bf16 %v527, %v526
    %v534 = vpack.c.bf16 %v529, %v528
    %v535 = vpack.c.bf16 %v531, %v530
    %v536 = vld [vmem:[%s5] sm:$0xf]
    %v537 = vld [vmem:[%s5 + $0x4] sm:$0xf]
    %v538 = vld [vmem:[%s5 + $0x8] sm:$0xf]
    %v539 = vld [vmem:[%s5 + $0xc] sm:$0xf]
    %v540 = vld [vmem:[%s5 + $0x10] sm:$0xf]
    %v541 = vld [vmem:[%s5 + $0x14] sm:$0xf]
    %v542 = vld [vmem:[%s5 + $0x18] sm:$0xf]
    %v543 = vld [vmem:[%s5 + $0x1c] sm:$0xf]
    %v544 = vld [vmem:[%s6] sm:$0x1]
    %v546 = vlaneseq
    %v547 = vshrl.u32 %v546, 7
    %v548 = vsub.s32 0, %v547
    %v549 = vrot.slane %v544, %v548
    %v559 = vunpack.c.l.b16 %v536
    %v560 = vunpack.c.l.b16 %v537
    %v561 = vunpack.c.l.b16 %v538
    %v562 = vunpack.c.l.b16 %v539
    %v563 = vunpack.c.l.b16 %v540
    %v564 = vunpack.c.l.b16 %v541
    %v565 = vunpack.c.l.b16 %v542
    %v566 = vunpack.c.l.b16 %v543
    %v567 = vpack.c.b16 %v560, %v559
    %v568 = vpack.c.b16 %v562, %v561
    %v569 = vpack.c.b16 %v564, %v563
    %v570 = vpack.c.b16 %v566, %v565
    %vm575 = vcmask 523264
    %v577 = vsel %vm575, %v532, 0
    %v580 = vsel %vm575, %v533, 0
    %v583 = vsel %vm575, %v534, 0
    %v586 = vsel %vm575, %v535, 0
    %588 = vmatprep.subr.bf16.mxu0 0
    %589 = vmatpush1.bf16.msra.mxu0 0
    %590 = vmatprep.subr.bf16.mxu0 0
    %591 = vmatpush1.bf16.msra.mxu0 0
    %592 = vmatprep.subr.bf16.mxu0 0
    %593 = vmatpush1.bf16.msra.mxu0 0
    %594 = vmatprep.subr.bf16.mxu0 0
    %595 = vmatpush1.bf16.msra.mxu0 0
    %596 = vmatprep.subr.bf16.mxu0 0
    %597 = vmatpush1.bf16.msra.mxu0 %v570
    %598 = vmatprep.subr.bf16.mxu0 0
    %599 = vmatpush1.bf16.msra.mxu0 %v569
    %600 = vmatprep.subr.bf16.mxu0 0
    %601 = vmatpush1.bf16.msra.mxu0 %v568
    %602 = vmatprep.subr.bf16.mxu0 0
    %603 = vmatpush1.bf16.msra.mxu0 %v567
    %604 = vmatprep.subr.bf16.mxu0 0
    %605 = vmatpush2.bf16.msra.mxu0 0
    %606 = vmatprep.subr.bf16.mxu0 0
    %607 = vmatpush2.bf16.msra.mxu0 0
    %608 = vmatprep.subr.bf16.mxu0 0
    %609 = vmatpush2.bf16.msra.mxu0 0
    %610 = vmatprep.subr.bf16.mxu0 0
    %611 = vmatpush2.bf16.msra.mxu0 0
    %612 = vmatprep.subr.bf16.mxu0 0
    %613 = vmatpush2.bf16.msra.mxu0 0
    %614 = vmatprep.subr.bf16.mxu0 0
    %615 = vmatpush2.bf16.msra.mxu0 0
    %616 = vmatprep.subr.bf16.mxu0 0
    %617 = vmatpush2.bf16.msra.mxu0 0
    %618 = vmatprep.subr.bf16.mxu0 0
    %619 = vmatpush2.bf16.msra.mxu0 0
    %620 = vmatprep.mubr.bf16.mxu0 0
    %621 = vmatmul.mubr.bf16.gmra.mxu0 %v577
    %v622 = vpop.f32.mrf.mxu0
    %v623 = vadd.f32 %v549, %v622
    %v624 = vpop.f32.mrf.mxu0
    %v625 = vpop.f32.mrf.mxu0
    %v626 = vadd.f32 %v549, %v625
    %v627 = vpop.f32.mrf.mxu0
    %628 = vmatprep.mubr.bf16.mxu0 0
    %629 = vmatmul.mubr.bf16.gmra.mxu0 %v580
    %v630 = vpop.f32.mrf.mxu0
    %v631 = vadd.f32 %v549, %v630
    %v632 = vpop.f32.mrf.mxu0
    %v633 = vpop.f32.mrf.mxu0
    %v634 = vadd.f32 %v549, %v633
    %v635 = vpop.f32.mrf.mxu0
    %636 = vmatprep.mubr.bf16.mxu0 0
    %637 = vmatmul.mubr.bf16.gmra.mxu0 %v583
    %v638 = vpop.f32.mrf.mxu0
    %v639 = vadd.f32 %v549, %v638
    %v640 = vpop.f32.mrf.mxu0
    %v641 = vpop.f32.mrf.mxu0
    %v642 = vadd.f32 %v549, %v641
    %v643 = vpop.f32.mrf.mxu0
    %644 = vmatprep.mubr.bf16.mxu0 0
    %645 = vmatmul.mubr.bf16.gmra.mxu0 %v586
    %v646 = vpop.f32.mrf.mxu0
    %v647 = vadd.f32 %v549, %v646
    %v648 = vpop.f32.mrf.mxu0
    %v649 = vpop.f32.mrf.mxu0
    %v650 = vadd.f32 %v549, %v649
    %v651 = vpop.f32.mrf.mxu0
    %652 = vdwg.mxu0
    %653 = vst [vmem:[#allocation7] sm:$0xff] %v623
    %654 = vst [vmem:[#allocation7 + $0x8] sm:$0xff] %v626
    %655 = vst [vmem:[#allocation7 + $0x10] sm:$0xff] %v631
    %656 = vst [vmem:[#allocation7 + $0x18] sm:$0xff] %v634
    %657 = vst [vmem:[#allocation7 + $0x20] sm:$0xff] %v639
    %658 = vst [vmem:[#allocation7 + $0x28] sm:$0xff] %v642
    %659 = vst [vmem:[#allocation7 + $0x30] sm:$0xff] %v647
    %660 = vst [vmem:[#allocation7 + $0x38] sm:$0xff] %v650
    // Predicated region
    $region38: #{tpu_custom_call.1} parent=1 // pred_check
      _
    $region39: #{tpu_custom_call.1} parent=1 // pred_check_branch
      %662 = sbr.rel (0) target = $region41
    $region40: #{tpu_custom_call.1} parent=1 // pred_region
      %s664 = ssub.s32 1024, 1024
      %665 = vsyncadd [#allocation4], %s664
      %s666 = sshll.u32 [#allocation7], 4
      %s667 = int_to_ptr.vmem [resolvable:$true] %s666
      %672 = dma.vmem_to_hbm [thread:$0]  %s667, 1024, %s7, [#allocation4], 128, 128, 8
    $region41: #{tpu_custom_call.1} parent=1 // pred_fallthru
      _
    // Predicated region
    $region42: #{tpu_custom_call.1} parent=1 // pred_check
      _
    $region43: #{tpu_custom_call.1} parent=1 // pred_check_branch
      %674 = sbr.rel (0) target = $region45
    $region44: #{tpu_custom_call.1} parent=1 // pred_region
      %675 = dma.done [#allocation4], 1024
    $region45: #{tpu_custom_call.1} parent=1 // pred_fallthru
      _
    %676 = vsyncpa [#allocation3], 1
    %677 = vsyncpa [#allocation6], 1
    %678 = vsyncpa [#allocation4], 1

</llo_original>
